<compile_context>
chip_gen: v7x
topology: tpu7x:2x2x1
jax: 0.10.0
libtpu: 0.0.40
codegen_flags: <defaults>
</compile_context>

<pallas_src>
import functools

import jax
import jax.numpy as jnp
from jax.experimental import pallas as pl
from jax.experimental.pallas import tpu as pltpu


def _round_up(x, m):
    return ((x + m - 1) // m) * m


VMEM_BUDGET_BYTES = 40 * 1024 * 1024  # conservative; leaves headroom on v7x (64 MiB/TC)


def choose_tm(B, D_pad, C_pad):
    """Batch-tile size: multiple of 16 (bf16 packs 16 sublanes/vreg), capped at
    512, shrunk until double-buffered x/out tiles + resident W^T fit VMEM."""
    tm = max(16, min(512, _round_up(B, 16)))
    while tm > 16:
        x_bytes = 2 * tm * D_pad * 4          # f32 x tile, double-buffered
        o_bytes = 2 * tm * C_pad * 4          # f32 out tile, double-buffered
        w_bytes = D_pad * C_pad * 2           # resident bf16 W^T
        if x_bytes + o_bytes + w_bytes + C_pad * 4 <= VMEM_BUDGET_BYTES:
            break
        tm //= 2
    return tm


def prepare_params(weight, bias):
    """One-time parameter prep (NOT per call): transpose to [D, C], zero-pad
    both dims up to multiples of 128 (lane-dense class dim), cast W to bf16."""
    C, D = weight.shape
    D_pad = _round_up(D, 128)
    C_pad = _round_up(C, 128)
    w_t = jnp.zeros((D_pad, C_pad), jnp.bfloat16)
    w_t = w_t.at[:D, :C].set(weight.T.astype(jnp.bfloat16))
    b2d = jnp.zeros((1, C_pad), jnp.float32)
    b2d = b2d.at[0, :C].set(bias.astype(jnp.float32))
    return w_t, b2d


def linear_kernel(x_ref, w_ref, b_ref, o_ref):
    """One batch tile: o = cast_bf16(x) @ W^T + b with f32 MXU accumulation,
    stored directly to the lane-dense (multiple-of-128 wide) output block.
    No accumulator scratch and no K loop: the full (padded) reduction dim is
    resident in this single dot."""
    o_ref[...] = (
        jnp.dot(x_ref[...].astype(jnp.bfloat16), w_ref[...],
                preferred_element_type=jnp.float32)
        + b_ref[...]
    )


@functools.partial(jax.jit, static_argnames=("num_classes", "tm"))
def linear_classifier(x, w_t_padded, b_padded, num_classes, *, tm):
    """Pallas equivalent of nn.Linear(input_dim, num_classes).forward(x).

    x:          [B, D]          float32
    w_t_padded: [D_pad, C_pad]  bf16   (pre-transposed, zero-padded weight)
    b_padded:   [1, C_pad]      f32    (zero-padded bias)
    returns     [B, num_classes] float32
    """
    B, D = x.shape
    D_pad, C_pad = w_t_padded.shape

    # Cheap static guards against a param-prep / call-site mismatch.
    assert D_pad % 128 == 0 and C_pad % 128 == 0, "W^T must be lane-padded to 128"
    assert D_pad >= D and C_pad >= num_classes
    assert b_padded.shape == (1, C_pad)
    assert tm % 8 == 0

    B_pad = _round_up(B, tm)

    # Single fused zero-pad (batch + reduction dims), only when actually needed.
    # x stays f32 here; the bf16 cast happens on the tile inside the kernel, so
    # there is no extra wrapper-side HBM pass just for the cast.
    x_p = x
    if (B_pad, D_pad) != (B, D):
        x_p = jnp.zeros((B_pad, D_pad), x.dtype).at[:B, :D].set(x)

    # 1-D grid over batch tiles only; with B_pad/tm >= 2 the 'parallel' axis
    # shards across both TensorCores on v7x (each TC holds its own W^T copy).
    grid = (B_pad // tm,)

    out = pl.pallas_call(
        linear_kernel,
        out_shape=jax.ShapeDtypeStruct((B_pad, C_pad), jnp.float32),
        grid=grid,
        in_specs=[
            pl.BlockSpec((tm, D_pad), lambda i: (i, 0)),       # streamed x tile
            pl.BlockSpec((D_pad, C_pad), lambda i: (0, 0)),    # VMEM-resident W^T
            pl.BlockSpec((1, C_pad), lambda i: (0, 0)),        # VMEM-resident bias
        ],
        out_specs=pl.BlockSpec((tm, C_pad), lambda i: (i, 0)),
        compiler_params=pltpu.CompilerParams(
            dimension_semantics=("parallel",),
            vmem_limit_bytes=48 * 1024 * 1024,  # stays under v7x's 64 MiB/TC
        ),
    )(x_p, w_t_padded, b_padded)

    # Slice away batch / lane padding to restore exact nn.Linear semantics.
    return out[:B, :num_classes]


# TODO(synk): at the deployed toy shape (8 x 256 -> 2, ~8K FLOPs) a standalone
# pallas_call is pure launch/DMA overhead; in production this GEMV should be
# fused into the preceding kernel's epilogue or left to XLA dot fusion.
# TODO(synk): for very large input_dim where a full-D tile no longer fits VMEM,
# reintroduce a K reduction grid axis (accumulating directly into the f32 o_ref).


if __name__ == "__main__":
    # Small shapes consistent with the module: flattened features -> classes.
    batch, input_dim, num_classes = 8, 256, 2

    key = jax.random.PRNGKey(0)
    kx, kw, kb = jax.random.split(key, 3)

    # Deterministic PyTorch-style init: U(-1/sqrt(in), 1/sqrt(in)).
    bound = 1.0 / (input_dim ** 0.5)
    weight = jax.random.uniform(kw, (num_classes, input_dim),
                                minval=-bound, maxval=bound, dtype=jnp.float32)
    bias = jax.random.uniform(kb, (num_classes,),
                              minval=-bound, maxval=bound, dtype=jnp.float32)
    x = jax.random.normal(kx, (batch, input_dim), dtype=jnp.float32)

    # One-time parameter preparation (no per-call transpose / padding of W).
    w_t_p, b_p = prepare_params(weight, bias)
    tm = choose_tm(batch, w_t_p.shape[0], w_t_p.shape[1])

    out = linear_classifier(x, w_t_p, b_p, num_classes, tm=tm)
    out = jax.block_until_ready(out)

    # Reference check against plain JAX (nn.Linear forward). bf16 inputs with
    # f32 accumulation -> relaxed tolerance vs. the f32 reference.
    ref = x @ weight.T + bias
    assert out.shape == (batch, num_classes)
    assert jnp.allclose(out, ref, atol=2e-2, rtol=2e-2), (
        f"max abs err {jnp.max(jnp.abs(out - ref))}")

    print("KERNEL_OK")
</pallas_src>

<mosaic_0001>
module attributes {stable_mosaic.version = 11 : i64} {
  func.func @linear_kernel(%arg0: i32, %arg1: memref<16x256xf32, #tpu.memory_space<vmem>>, %arg2: memref<256x128xbf16, #tpu.memory_space<vmem>>, %arg3: memref<1x128xf32, #tpu.memory_space<vmem>>, %arg4: memref<16x128xf32, #tpu.memory_space<vmem>>) attributes {dimension_semantics = [#tpu.dimension_semantics<parallel>], iteration_bounds = array<i64: 1>, scalar_prefetch = 0 : i64, scratch_operands = 0 : i64, tpu.core_type = #tpu.core_type<tc>, window_params = [{transform_indices = @transform_0, window_bounds = array<i64: 16, 256>}, {pipeline_mode = #tpu.pipeline_mode<synchronous>, transform_indices = @transform_1, window_bounds = array<i64: 256, 128>}, {pipeline_mode = #tpu.pipeline_mode<synchronous>, transform_indices = @transform_2, window_bounds = array<i64: 1, 128>}, {transform_indices = @transform_3, window_bounds = array<i64: 16, 128>}]} {
    %c0 = arith.constant 0 : index
    %c0_0 = arith.constant 0 : index
    %0 = vector.load %arg1[%c0, %c0_0] : memref<16x256xf32, #tpu.memory_space<vmem>>, vector<16x256xf32>
    %1 = arith.truncf %0 : vector<16x256xf32> to vector<16x256xbf16>
    %c0_1 = arith.constant 0 : index
    %c0_2 = arith.constant 0 : index
    %2 = vector.load %arg2[%c0_1, %c0_2] : memref<256x128xbf16, #tpu.memory_space<vmem>>, vector<256x128xbf16>
    %cst = arith.constant dense<0.000000e+00> : vector<16x128xf32>
    %3 = tpu.matmul %1, %2, %cst {dimension_numbers = #tpu.dot_dimension_numbers<[1], [0], [0], [1], [0, 0, 1, 1], [], []>} : vector<16x256xbf16>, vector<256x128xbf16>, vector<16x128xf32> -> vector<16x128xf32>
    %c0_3 = arith.constant 0 : index
    %c0_4 = arith.constant 0 : index
    %4 = vector.load %arg3[%c0_3, %c0_4] : memref<1x128xf32, #tpu.memory_space<vmem>>, vector<1x128xf32>
    %5 = vector.broadcast %4 : vector<1x128xf32> to vector<16x128xf32>
    %6 = arith.addf %3, %5 : vector<16x128xf32>
    %c0_5 = arith.constant 0 : index
    %c0_6 = arith.constant 0 : index
    %7 = vector.load %arg4[%c0_5, %c0_6] : memref<16x128xf32, #tpu.memory_space<vmem>>, vector<16x128xf32>
    tpu.vector_store %arg4[%c0_5, %c0_6], %6 {strides = array<i32>} : memref<16x128xf32, #tpu.memory_space<vmem>>, vector<16x128xf32>,
    return
  }
  func.func @transform_0(%arg0: i32) -> (i32, i32) {
    %c0_i32 = arith.constant 0 : i32
    %c0_i32_0 = arith.constant 0 : i32
    return %arg0, %c0_i32 : i32, i32
  }
  func.func @transform_1(%arg0: i32) -> (i32, i32) {
    %c0_i32 = arith.constant 0 : i32
    %c0_i32_0 = arith.constant 0 : i32
    %c0_i32_1 = arith.constant 0 : i32
    return %c0_i32, %c0_i32_0 : i32, i32
  }
  func.func @transform_2(%arg0: i32) -> (i32, i32) {
    %c0_i32 = arith.constant 0 : i32
    %c0_i32_0 = arith.constant 0 : i32
    %c0_i32_1 = arith.constant 0 : i32
    return %c0_i32, %c0_i32_0 : i32, i32
  }
  func.func @transform_3(%arg0: i32) -> (i32, i32) {
    %c0_i32 = arith.constant 0 : i32
    %c0_i32_0 = arith.constant 0 : i32
    return %arg0, %c0_i32 : i32, i32
  }
}

</mosaic_0001>

<llo_original>
// kernel: linear_classifier.1
$region0: #{linear_classifier.1}
  #allocation0 [shape = 'u32[]', space=smem, size = 0x4, offset = 0x4, fixed_abs, tag = 'smem constant byte address 0x4 - core index']
  #allocation1 [shape = 'u32[144,128]{1,0:T(1,128)}', space=vmem, size = 0x12000, scoped, tag = 'internal scratch']
  %s0 = inlined_call_operand.vmem [shape: f32[16,256], index: 0, kind: input, shape index: {}]
  %s1 = inlined_call_operand.hbm [shape: bf16[256,128], index: 1, kind: input, shape index: {}]
  %s2 = inlined_call_operand.vmem [shape: f32[1,128], index: 2, kind: input, shape index: {}]
  %s3 = inlined_call_operand.vmem [shape: f32[16,128], index: 3, kind: output, shape index: {}]
  %s4 = sld [smem:[#allocation0]]
  $region26: #{linear_classifier.1} parent=0
    _
  %s6 = ssub.s32 1, %s4
  %s7 = scalar_select 0, %s6, %s4
  $region1: #{linear_classifier.1} parent=0
    #allocation2 [shape = 'u8[65536]{0}', space=vmem, size = 0x10000, scoped, tag = 'input window, operand 1, single buffered']
    #allocation3 [shape = 's32[1]{0}', space=sflag, size = 0x4, scoped, tag = 'scoped memory for linear_classifier.1']
    %8 = vsyncpa [#allocation3], 0
    // Predicated region
    $region2: #{linear_classifier.1} parent=1 // pred_check
      _
    $region3: #{linear_classifier.1} parent=1 // pred_check_branch
      %10 = sbr.rel (0) target = $region5
    $region4: #{linear_classifier.1} parent=1 // pred_region
      _
    $region5: #{linear_classifier.1} parent=1 // pred_fallthru
      _
    // Predicated region
    $region6: #{linear_classifier.1} parent=1 // pred_check
      _
    $region7: #{linear_classifier.1} parent=1 // pred_check_branch
      %12 = sbr.rel (0) target = $region9
    $region8: #{linear_classifier.1} parent=1 // pred_region
      %s14 = ssub.s32 2048, 2048
      %15 = vsyncadd [#allocation3], %s14
      %s16 = sshll.u32 [#allocation2], 4
      %s17 = int_to_ptr.vmem [resolvable:$true] %s16
      %22 = dma.hbm_to_vmem [thread:$0]  %s1, 2048, %s17, [#allocation3], 64, 64, 4
    $region9: #{linear_classifier.1} parent=1 // pred_fallthru
      _
    // Predicated region
    $region10: #{linear_classifier.1} parent=1 // pred_check
      _
    $region11: #{linear_classifier.1} parent=1 // pred_check_branch
      %24 = sbr.rel (0) target = $region13
    $region12: #{linear_classifier.1} parent=1 // pred_region
      _
    $region13: #{linear_classifier.1} parent=1 // pred_fallthru
      _
    // Predicated region
    $region14: #{linear_classifier.1} parent=1 // pred_check
      _
    $region15: #{linear_classifier.1} parent=1 // pred_check_branch
      %26 = sbr.rel (0) target = $region17
    $region16: #{linear_classifier.1} parent=1 // pred_region
      %27 = dma.done [#allocation3], 2048
    $region17: #{linear_classifier.1} parent=1 // pred_fallthru
      _
    %v29 = vld [vmem:[%s0] sm:$0xff]
    %v30 = vld [vmem:[%s0 + $0x8] sm:$0xff]
    %v31 = vld [vmem:[%s0 + $0x10] sm:$0xff]
    %v32 = vld [vmem:[%s0 + $0x18] sm:$0xff]
    %v33 = vpack.c.bf16 %v31, %v29
    %v34 = vpack.c.bf16 %v32, %v30
    %v35 = vld [vmem:[#allocation2] sm:$0xf]
    %v36 = vld [vmem:[#allocation2 + $0x4] sm:$0xf]
    %v37 = vld [vmem:[#allocation2 + $0x8] sm:$0xf]
    %v38 = vld [vmem:[#allocation2 + $0xc] sm:$0xf]
    %v39 = vld [vmem:[#allocation2 + $0x10] sm:$0xf]
    %v40 = vld [vmem:[#allocation2 + $0x14] sm:$0xf]
    %v41 = vld [vmem:[#allocation2 + $0x18] sm:$0xf]
    %v42 = vld [vmem:[#allocation2 + $0x1c] sm:$0xf]
    %v43 = vld [vmem:[#allocation2 + $0x20] sm:$0xf]
    %v44 = vld [vmem:[#allocation2 + $0x24] sm:$0xf]
    %v45 = vld [vmem:[#allocation2 + $0x28] sm:$0xf]
    %v46 = vld [vmem:[#allocation2 + $0x2c] sm:$0xf]
    %v47 = vld [vmem:[#allocation2 + $0x30] sm:$0xf]
    %v48 = vld [vmem:[#allocation2 + $0x34] sm:$0xf]
    %v49 = vld [vmem:[#allocation2 + $0x38] sm:$0xf]
    %v50 = vld [vmem:[#allocation2 + $0x3c] sm:$0xf]
    %v51 = vld [vmem:[#allocation2 + $0x40] sm:$0xf]
    %v52 = vld [vmem:[#allocation2 + $0x44] sm:$0xf]
    %v53 = vld [vmem:[#allocation2 + $0x48] sm:$0xf]
    %v54 = vld [vmem:[#allocation2 + $0x4c] sm:$0xf]
    %v55 = vld [vmem:[#allocation2 + $0x50] sm:$0xf]
    %v56 = vld [vmem:[#allocation2 + $0x54] sm:$0xf]
    %v57 = vld [vmem:[#allocation2 + $0x58] sm:$0xf]
    %v58 = vld [vmem:[#allocation2 + $0x5c] sm:$0xf]
    %v59 = vld [vmem:[#allocation2 + $0x60] sm:$0xf]
    %v60 = vld [vmem:[#allocation2 + $0x64] sm:$0xf]
    %v61 = vld [vmem:[#allocation2 + $0x68] sm:$0xf]
    %v62 = vld [vmem:[#allocation2 + $0x6c] sm:$0xf]
    %v63 = vld [vmem:[#allocation2 + $0x70] sm:$0xf]
    %v64 = vld [vmem:[#allocation2 + $0x74] sm:$0xf]
    %v65 = vld [vmem:[#allocation2 + $0x78] sm:$0xf]
    %v66 = vld [vmem:[#allocation2 + $0x7c] sm:$0xf]
    %v67 = vld [vmem:[%s2] sm:$0x1]
    %v69 = vlaneseq
    %v70 = vshrl.u32 %v69, 7
    %v71 = vsub.s32 0, %v70
    %v72 = vrot.slane %v67, %v71
    %v106 = vunpack.c.l.b16 %v35
    %v107 = vunpack.c.l.b16 %v36
    %v108 = vunpack.c.l.b16 %v37
    %v109 = vunpack.c.l.b16 %v38
    %v110 = vunpack.c.l.b16 %v39
    %v111 = vunpack.c.l.b16 %v40
    %v112 = vunpack.c.l.b16 %v41
    %v113 = vunpack.c.l.b16 %v42
    %v114 = vunpack.c.l.b16 %v43
    %v115 = vunpack.c.l.b16 %v44
    %v116 = vunpack.c.l.b16 %v45
    %v117 = vunpack.c.l.b16 %v46
    %v118 = vunpack.c.l.b16 %v47
    %v119 = vunpack.c.l.b16 %v48
    %v120 = vunpack.c.l.b16 %v49
    %v121 = vunpack.c.l.b16 %v50
    %v122 = vunpack.c.l.b16 %v51
    %v123 = vunpack.c.l.b16 %v52
    %v124 = vunpack.c.l.b16 %v53
    %v125 = vunpack.c.l.b16 %v54
    %v126 = vunpack.c.l.b16 %v55
    %v127 = vunpack.c.l.b16 %v56
    %v128 = vunpack.c.l.b16 %v57
    %v129 = vunpack.c.l.b16 %v58
    %v130 = vunpack.c.l.b16 %v59
    %v131 = vunpack.c.l.b16 %v60
    %v132 = vunpack.c.l.b16 %v61
    %v133 = vunpack.c.l.b16 %v62
    %v134 = vunpack.c.l.b16 %v63
    %v135 = vunpack.c.l.b16 %v64
    %v136 = vunpack.c.l.b16 %v65
    %v137 = vunpack.c.l.b16 %v66
    %v138 = vpack.c.b16 %v107, %v106
    %v139 = vpack.c.b16 %v109, %v108
    %v140 = vpack.c.b16 %v111, %v110
    %v141 = vpack.c.b16 %v113, %v112
    %v142 = vpack.c.b16 %v115, %v114
    %v143 = vpack.c.b16 %v117, %v116
    %v144 = vpack.c.b16 %v119, %v118
    %v145 = vpack.c.b16 %v121, %v120
    %v146 = vpack.c.b16 %v123, %v122
    %v147 = vpack.c.b16 %v125, %v124
    %v148 = vpack.c.b16 %v127, %v126
    %v149 = vpack.c.b16 %v129, %v128
    %v150 = vpack.c.b16 %v131, %v130
    %v151 = vpack.c.b16 %v133, %v132
    %v152 = vpack.c.b16 %v135, %v134
    %v153 = vpack.c.b16 %v137, %v136
    %170 = vmatprep.subr.bf16.mxu0 0
    %171 = vmatpush1.bf16.msra.mxu0 %v138
    %172 = vmatprep.subr.bf16.mxu0 0
    %173 = vmatpush1.bf16.msra.mxu0 %v139
    %174 = vmatprep.subr.bf16.mxu0 0
    %175 = vmatpush1.bf16.msra.mxu0 %v140
    %176 = vmatprep.subr.bf16.mxu0 0
    %177 = vmatpush1.bf16.msra.mxu0 %v141
    %178 = vmatprep.subr.bf16.mxu0 0
    %179 = vmatpush1.bf16.msra.mxu0 %v142
    %180 = vmatprep.subr.bf16.mxu0 0
    %181 = vmatpush1.bf16.msra.mxu0 %v143
    %182 = vmatprep.subr.bf16.mxu0 0
    %183 = vmatpush1.bf16.msra.mxu0 %v144
    %184 = vmatprep.subr.bf16.mxu0 0
    %185 = vmatpush1.bf16.msra.mxu0 %v145
    %186 = vmatprep.subr.bf16.mxu0 0
    %187 = vmatpush1.bf16.msra.mxu0 %v146
    %188 = vmatprep.subr.bf16.mxu0 0
    %189 = vmatpush1.bf16.msra.mxu0 %v147
    %190 = vmatprep.subr.bf16.mxu0 0
    %191 = vmatpush1.bf16.msra.mxu0 %v148
    %192 = vmatprep.subr.bf16.mxu0 0
    %193 = vmatpush1.bf16.msra.mxu0 %v149
    %194 = vmatprep.subr.bf16.mxu0 0
    %195 = vmatpush1.bf16.msra.mxu0 %v150
    %196 = vmatprep.subr.bf16.mxu0 0
    %197 = vmatpush1.bf16.msra.mxu0 %v151
    %198 = vmatprep.subr.bf16.mxu0 0
    %199 = vmatpush1.bf16.msra.mxu0 %v152
    %200 = vmatprep.subr.bf16.mxu0 0
    %201 = vmatpush1.bf16.msra.mxu0 %v153
    %202 = vmatprep.mubr.bf16.mxu0 %v34
    %203 = vmatmul.mubr.bf16.gmra.mrb[0].mxu0 %v33
    %v204 = vpop.f32.mrb[0].mxu0
    %v205 = vadd.f32 %v72, %v204
    %v206 = vpop.f32.mrb[0].mxu0
    %v207 = vpop.f32.mrb[0].mxu0
    %v208 = vadd.f32 %v72, %v207
    %v209 = vpop.f32.mrb[0].mxu0
    %210 = vdwg.mxu0
    %211 = vst [vmem:[%s3] sm:$0xff] %v205
    %212 = vst [vmem:[%s3 + $0x8] sm:$0xff] %v208
    // Predicated region
    $region18: #{linear_classifier.1} parent=1 // pred_check
      _
    $region19: #{linear_classifier.1} parent=1 // pred_check_branch
      %214 = sbr.rel (0) target = $region21
    $region20: #{linear_classifier.1} parent=1 // pred_region
      _
    $region21: #{linear_classifier.1} parent=1 // pred_fallthru
      _
    // Predicated region
    $region22: #{linear_classifier.1} parent=1 // pred_check
      _
    $region23: #{linear_classifier.1} parent=1 // pred_check_branch
      %216 = sbr.rel (0) target = $region25
    $region24: #{linear_classifier.1} parent=1 // pred_region
      _
    $region25: #{linear_classifier.1} parent=1 // pred_fallthru
      _
    %217 = vsyncpa [#allocation3], 1

</llo_original>
